<compile_context>
chip_gen: v5e
topology: v5e:2x2
jax: 0.10.0
libtpu: 0.0.40
codegen_flags: <defaults>
</compile_context>

<pallas_src>
import jax
import jax.numpy as jnp
from jax import lax
from jax.experimental import pallas as pl
from jax.experimental.pallas import tpu as pltpu


def _round_up(x, m):
    return ((x + m - 1) // m) * m


# ----------------------------------------------------------------------------
# Fused kernel, 'cls' pooling.
#   ids0:   (TB, 1)   int32 first-token ids
#   table:  (Vp, Hp)  bf16 embedding table (zero-padded)
#   w_enc:  (Hp, Hp)  bf16, b_enc: (1, Hp) f32   synthetic encoder dense layer
#   w_head: (Hp, Op)  bf16, b_head: (1, Op) f32  [project | classifier | pad]
#   out:    (TB, Op)  f32 lane-dense combined output
# ----------------------------------------------------------------------------
def _fused_cls_kernel(ids0_ref, table_ref, w_enc_ref, b_enc_ref,
                      w_head_ref, b_head_ref, out_ref):
    TB = ids0_ref.shape[0]
    Vp = table_ref.shape[0]

    # In-kernel embedding gather as a one-hot MXU matmul.
    ids0 = ids0_ref[...]                                          # (TB, 1)
    iota_v = lax.broadcasted_iota(jnp.int32, (TB, Vp), 1)
    onehot = jnp.where(ids0 == iota_v, 1.0, 0.0).astype(jnp.bfloat16)
    emb0 = jnp.dot(onehot, table_ref[...],
                   preferred_element_type=jnp.float32)            # (TB, Hp)

    pooled = jnp.tanh(
        jnp.dot(emb0.astype(jnp.bfloat16), w_enc_ref[...],
                preferred_element_type=jnp.float32) + b_enc_ref[...])

    out_ref[...] = (
        jnp.dot(pooled.astype(jnp.bfloat16), w_head_ref[...],
                preferred_element_type=jnp.float32) + b_head_ref[...])


def fused_forward_cls(ids0, table, w_enc, b_enc, w_head, b_head):
    Bp = ids0.shape[0]
    Vp, Hp = table.shape
    Op = w_head.shape[1]
    tile_b = Bp if Bp <= 256 else 256
    nb = Bp // tile_b
    return pl.pallas_call(
        _fused_cls_kernel,
        out_shape=jax.ShapeDtypeStruct((Bp, Op), jnp.float32),
        grid=(nb,),
        in_specs=[
            pl.BlockSpec((tile_b, 1), lambda i: (i, 0)),
            pl.BlockSpec((Vp, Hp), lambda i: (0, 0)),
            pl.BlockSpec((Hp, Hp), lambda i: (0, 0)),
            pl.BlockSpec((1, Hp), lambda i: (0, 0)),
            pl.BlockSpec((Hp, Op), lambda i: (0, 0)),
            pl.BlockSpec((1, Op), lambda i: (0, 0)),
        ],
        out_specs=pl.BlockSpec((tile_b, Op), lambda i: (i, 0)),
        compiler_params=pltpu.CompilerParams(
            dimension_semantics=("parallel",)),
    )(ids0, table, w_enc, b_enc, w_head, b_head)


# ----------------------------------------------------------------------------
# Fused kernel, 'mean' pooling.
#   ids_col:   (TB*S, 1)  int32 ids (row-major flatten of (TB, S))
#   mask_flat: (1, TB*S)  f32 attention mask (row-major flatten)
#   weights as above; out: (TB, Op)
# ----------------------------------------------------------------------------
def _fused_mean_kernel(ids_ref, maskf_ref, table_ref, w_enc_ref, b_enc_ref,
                       w_head_ref, b_head_ref, out_ref):
    N = ids_ref.shape[0]            # TB * S tokens in this batch tile
    TB = out_ref.shape[0]
    S = N // TB
    Vp = table_ref.shape[0]

    # In-kernel embedding gather as a one-hot MXU matmul.
    ids = ids_ref[...]                                            # (N, 1)
    iota_v = lax.broadcasted_iota(jnp.int32, (N, Vp), 1)
    onehot = jnp.where(ids == iota_v, 1.0, 0.0).astype(jnp.bfloat16)  # (N, Vp)
    emb = jnp.dot(onehot, table_ref[...],
                  preferred_element_type=jnp.float32)             # (N, Hp)

    # Per-token synthetic encoder; hid stays flat (no reshape back to 3D).
    hid = jnp.tanh(
        jnp.dot(emb.astype(jnp.bfloat16), w_enc_ref[...],
                preferred_element_type=jnp.float32) + b_enc_ref[...])  # (N, Hp)

    # Masked mean pooling as ONE dense (TB, N) @ (N, Hp) MXU pass.
    # pool[b, n] = (n // S == b) * mask[n] / denom[b]
    mask_flat = maskf_ref[...]                                    # (1, N)
    row_b = lax.broadcasted_iota(jnp.int32, (TB, N), 0)
    col_b = lax.broadcasted_iota(jnp.int32, (TB, N), 1) // S
    pool_un = jnp.where(row_b == col_b, mask_flat, 0.0)           # (TB, N)
    denom = jnp.maximum(jnp.sum(pool_un, axis=-1, keepdims=True), 1e-9)
    pool = pool_un * pl.reciprocal(denom, approx=True)            # EUP slot
    pooled = jnp.dot(pool.astype(jnp.bfloat16), hid.astype(jnp.bfloat16),
                     preferred_element_type=jnp.float32)          # (TB, Hp)

    out_ref[...] = (
        jnp.dot(pooled.astype(jnp.bfloat16), w_head_ref[...],
                preferred_element_type=jnp.float32) + b_head_ref[...])


def fused_forward_mean(ids_col, mask_flat, table, w_enc, b_enc, w_head, b_head,
                       *, batch, seq):
    Bp, S = batch, seq
    Vp, Hp = table.shape
    Op = w_head.shape[1]
    tile_b = Bp if Bp <= 256 else 256
    nb = Bp // tile_b
    return pl.pallas_call(
        _fused_mean_kernel,
        out_shape=jax.ShapeDtypeStruct((Bp, Op), jnp.float32),
        grid=(nb,),
        in_specs=[
            pl.BlockSpec((tile_b * S, 1), lambda i: (i, 0)),
            pl.BlockSpec((1, tile_b * S), lambda i: (0, i)),
            pl.BlockSpec((Vp, Hp), lambda i: (0, 0)),
            pl.BlockSpec((Hp, Hp), lambda i: (0, 0)),
            pl.BlockSpec((1, Hp), lambda i: (0, 0)),
            pl.BlockSpec((Hp, Op), lambda i: (0, 0)),
            pl.BlockSpec((1, Op), lambda i: (0, 0)),
        ],
        out_specs=pl.BlockSpec((tile_b, Op), lambda i: (i, 0)),
        compiler_params=pltpu.CompilerParams(
            dimension_semantics=("parallel",)),
    )(ids_col, mask_flat, table, w_enc, b_enc, w_head, b_head)


# ----------------------------------------------------------------------------
# Module wrapper with deterministic synthetic parameters.
# ----------------------------------------------------------------------------
class StudentClassifierPallas:
    def __init__(self, vocab_size=100, hidden_size=32, num_labels=4,
                 pooling="cls", project_dim=384, seed=0):
        # TODO(synk): pretrained HF AutoModel encoder has no Pallas equivalent;
        # replaced with a deterministic embedding + per-token dense+tanh layer.
        self.pooling = pooling
        self.hidden_size = hidden_size
        self.num_labels = num_labels
        self.project_dim = project_dim
        self.vocab_size = vocab_size

        H = hidden_size
        P, L = project_dim, num_labels
        Hp = _round_up(H, 128)                 # lane-padded hidden
        Op = _round_up(P + L, 128)             # lane-padded fused head output
        Vp = _round_up(vocab_size, 128)        # padded vocab (one-hot lanes)
        self.Hp, self.Op, self.Vp = Hp, Op, Vp

        ks = jax.random.split(jax.random.PRNGKey(seed), 7)
        scale = 0.02
        f32 = jnp.float32
        # raw (logical-size) f32 parameters, also used by the pure-JAX reference
        self.embedding_raw = scale * jax.random.normal(ks[0], (vocab_size, H), f32)
        self.w_enc_raw = scale * jax.random.normal(ks[1], (H, H), f32)
        self.b_enc_raw = scale * jax.random.normal(ks[2], (1, H), f32)
        self.w_proj_raw = scale * jax.random.normal(ks[3], (H, P), f32)
        self.b_proj_raw = scale * jax.random.normal(ks[4], (1, P), f32)
        self.w_cls_raw = scale * jax.random.normal(ks[5], (H, L), f32)
        self.b_cls_raw = scale * jax.random.normal(ks[6], (1, L), f32)

        # zero-padded, lane-dense kernel parameters.  Matmul operands in bf16
        # (half DMA / half MXU cycles); biases stay f32 so all elementwise work
        # stays f32 (v5e has no bf16 VPU).  Padding is exact: padded lanes of
        # emb/hid/pooled stay zero and contribute nothing downstream.
        self.table = (jnp.zeros((Vp, Hp), f32)
                      .at[:vocab_size, :H].set(self.embedding_raw)
                      ).astype(jnp.bfloat16)
        self.w_enc = (jnp.zeros((Hp, Hp), f32)
                      .at[:H, :H].set(self.w_enc_raw)).astype(jnp.bfloat16)
        self.b_enc = jnp.zeros((1, Hp), f32).at[:, :H].set(self.b_enc_raw)
        self.w_head = (jnp.zeros((Hp, Op), f32)
                       .at[:H, :P].set(self.w_proj_raw)
                       .at[:H, P:P + L].set(self.w_cls_raw)).astype(jnp.bfloat16)
        self.b_head = (jnp.zeros((1, Op), f32)
                       .at[:, :P].set(self.b_proj_raw)
                       .at[:, P:P + L].set(self.b_cls_raw))

    def __call__(self, input_ids, attention_mask, return_embedding=False):
        B, S = input_ids.shape
        P, L = self.project_dim, self.num_labels
        # batch tile: multiple of 8 sublanes (unmasked vst), capped at 256 rows
        # (one full v6e/v7x MXU pass; 2x the v5e 128-row MXU).
        tile_b = min(_round_up(B, 8), 256)
        Bp = _round_up(B, tile_b)
        pad_b = Bp - B

        if self.pooling == "cls":
            # The synthetic encoder is strictly per-token, so the CLS hidden
            # state depends only on token 0: only the (Bp, 1) id column is
            # transferred.  (Would NOT hold for a real contextual encoder.)
            ids0 = input_ids[:, :1].astype(jnp.int32)
            if pad_b:
                ids0 = jnp.pad(ids0, ((0, pad_b), (0, 0)))
            out = fused_forward_cls(ids0, self.table, self.w_enc, self.b_enc,
                                    self.w_head, self.b_head)
        elif self.pooling == "mean":
            ids = input_ids.astype(jnp.int32)
            mask = attention_mask.astype(jnp.float32)
            if pad_b:
                ids = jnp.pad(ids, ((0, pad_b), (0, 0)))
                mask = jnp.pad(mask, ((0, pad_b), (0, 0)))
            # Layout plumbing only (free, row-major-preserving reshapes in the
            # wrapper): ids on the sublane axis, mask on the lane axis, so the
            # kernel needs no relayout reshapes.
            ids_col = ids.reshape(Bp * S, 1)
            mask_flat = mask.reshape(1, Bp * S)
            out = fused_forward_mean(ids_col, mask_flat, self.table,
                                     self.w_enc, self.b_enc,
                                     self.w_head, self.b_head,
                                     batch=Bp, seq=S)
        else:
            raise ValueError("Invalid pooling method")

        out = out[:B]
        projected = out[:, :P]
        if return_embedding:
            return projected
        logits = out[:, P:P + L]
        return logits, projected

    # pure-JAX reference (unpadded f32 params) for correctness checking.
    def reference(self, input_ids, attention_mask):
        emb = jnp.take(self.embedding_raw, input_ids, axis=0)      # (B, S, H)
        hid = jnp.tanh(emb @ self.w_enc_raw + self.b_enc_raw)      # (B, S, H)
        if self.pooling == "cls":
            pooled = hid[:, 0]
        elif self.pooling == "mean":
            m = attention_mask.astype(jnp.float32)[:, :, None]
            pooled = (hid * m).sum(axis=1) / jnp.maximum(m.sum(axis=1), 1e-9)
        else:
            raise ValueError("Invalid pooling method")
        projected = pooled @ self.w_proj_raw + self.b_proj_raw
        logits = pooled @ self.w_cls_raw + self.b_cls_raw
        return logits, projected


if __name__ == "__main__":
    key = jax.random.PRNGKey(0)
    k_ids, _ = jax.random.split(key)

    B, S = 2, 8
    input_ids = jax.random.randint(k_ids, (B, S), 0, 100, dtype=jnp.int32)
    # attention mask: first row fully valid, second row last 3 tokens padded
    attention_mask = jnp.array(
        [[1] * S, [1] * (S - 3) + [0] * 3], dtype=jnp.int32)

    model = None
    for pooling in ("cls", "mean"):
        model = StudentClassifierPallas(pooling=pooling)
        logits, projected = model(input_ids, attention_mask)
        jax.block_until_ready((logits, projected))
        assert logits.shape == (B, 4) and projected.shape == (B, 384)

        ref_logits, ref_projected = model.reference(input_ids, attention_mask)
        assert jnp.allclose(logits, ref_logits, atol=2e-3, rtol=2e-2)
        assert jnp.allclose(projected, ref_projected, atol=2e-3, rtol=2e-2)

    # return_embedding path (mean model)
    emb_only = model(input_ids, attention_mask, return_embedding=True)
    jax.block_until_ready(emb_only)
    assert emb_only.shape == (B, 384)

    print("KERNEL_OK")
</pallas_src>

<mosaic_0001>
module attributes {stable_mosaic.version = 11 : i64} {
  func.func @_fused_cls_kernel(%arg0: i32, %arg1: memref<8x1xi32, #tpu.memory_space<vmem>>, %arg2: memref<128x128xbf16, #tpu.memory_space<vmem>>, %arg3: memref<128x128xbf16, #tpu.memory_space<vmem>>, %arg4: memref<1x128xf32, #tpu.memory_space<vmem>>, %arg5: memref<128x512xbf16, #tpu.memory_space<vmem>>, %arg6: memref<1x512xf32, #tpu.memory_space<vmem>>, %arg7: memref<8x512xf32, #tpu.memory_space<vmem>>) attributes {dimension_semantics = [#tpu.dimension_semantics<parallel>], iteration_bounds = array<i64: 1>, scalar_prefetch = 0 : i64, scratch_operands = 0 : i64, tpu.core_type = #tpu.core_type<tc>, window_params = [{transform_indices = @transform_0, window_bounds = array<i64: 8, 1>}, {pipeline_mode = #tpu.pipeline_mode<synchronous>, transform_indices = @transform_1, window_bounds = array<i64: 128, 128>}, {pipeline_mode = #tpu.pipeline_mode<synchronous>, transform_indices = @transform_2, window_bounds = array<i64: 128, 128>}, {pipeline_mode = #tpu.pipeline_mode<synchronous>, transform_indices = @transform_3, window_bounds = array<i64: 1, 128>}, {pipeline_mode = #tpu.pipeline_mode<synchronous>, transform_indices = @transform_4, window_bounds = array<i64: 128, 512>}, {pipeline_mode = #tpu.pipeline_mode<synchronous>, transform_indices = @transform_5, window_bounds = array<i64: 1, 512>}, {transform_indices = @transform_6, window_bounds = array<i64: 8, 512>}]} {
    %c0 = arith.constant 0 : index
    %c0_0 = arith.constant 0 : index
    %0 = vector.load %arg1[%c0, %c0_0] : memref<8x1xi32, #tpu.memory_space<vmem>>, vector<8x1xi32>
    %1 = tpu.iota {dimensions = array<i32: 1>} : vector<8x128xi32>
    %2 = vector.broadcast %0 : vector<8x1xi32> to vector<8x128xi32>
    %3 = arith.cmpi eq, %2, %1 : vector<8x128xi32>
    %cst = arith.constant 1.000000e+00 : f32
    %cst_1 = arith.constant 0.000000e+00 : f32
    %4 = vector.broadcast %cst : f32 to vector<8x128xf32>
    %5 = vector.broadcast %cst_1 : f32 to vector<8x128xf32>
    %6 = arith.select %3, %4, %5 : vector<8x128xi1>, vector<8x128xf32>
    %7 = arith.truncf %6 : vector<8x128xf32> to vector<8x128xbf16>
    %c0_2 = arith.constant 0 : index
    %c0_3 = arith.constant 0 : index
    %8 = vector.load %arg2[%c0_2, %c0_3] : memref<128x128xbf16, #tpu.memory_space<vmem>>, vector<128x128xbf16>
    %cst_4 = arith.constant dense<0.000000e+00> : vector<8x128xf32>
    %9 = tpu.matmul %7, %8, %cst_4 {dimension_numbers = #tpu.dot_dimension_numbers<[1], [0], [0], [1], [0, 0, 1, 1], [], []>} : vector<8x128xbf16>, vector<128x128xbf16>, vector<8x128xf32> -> vector<8x128xf32>
    %10 = arith.truncf %9 : vector<8x128xf32> to vector<8x128xbf16>
    %c0_5 = arith.constant 0 : index
    %c0_6 = arith.constant 0 : index
    %11 = vector.load %arg3[%c0_5, %c0_6] : memref<128x128xbf16, #tpu.memory_space<vmem>>, vector<128x128xbf16>
    %cst_7 = arith.constant dense<0.000000e+00> : vector<8x128xf32>
    %12 = tpu.matmul %10, %11, %cst_7 {dimension_numbers = #tpu.dot_dimension_numbers<[1], [0], [0], [1], [0, 0, 1, 1], [], []>} : vector<8x128xbf16>, vector<128x128xbf16>, vector<8x128xf32> -> vector<8x128xf32>
    %c0_8 = arith.constant 0 : index
    %c0_9 = arith.constant 0 : index
    %13 = vector.load %arg4[%c0_8, %c0_9] : memref<1x128xf32, #tpu.memory_space<vmem>>, vector<1x128xf32>
    %14 = vector.broadcast %13 : vector<1x128xf32> to vector<8x128xf32>
    %15 = arith.addf %12, %14 : vector<8x128xf32>
    %16 = math.tanh %15 : vector<8x128xf32>
    %17 = arith.truncf %16 : vector<8x128xf32> to vector<8x128xbf16>
    %c0_10 = arith.constant 0 : index
    %c0_11 = arith.constant 0 : index
    %18 = vector.load %arg5[%c0_10, %c0_11] : memref<128x512xbf16, #tpu.memory_space<vmem>>, vector<128x512xbf16>
    %cst_12 = arith.constant dense<0.000000e+00> : vector<8x512xf32>
    %19 = tpu.matmul %17, %18, %cst_12 {dimension_numbers = #tpu.dot_dimension_numbers<[1], [0], [0], [1], [0, 0, 1, 1], [], []>} : vector<8x128xbf16>, vector<128x512xbf16>, vector<8x512xf32> -> vector<8x512xf32>
    %c0_13 = arith.constant 0 : index
    %c0_14 = arith.constant 0 : index
    %20 = vector.load %arg6[%c0_13, %c0_14] : memref<1x512xf32, #tpu.memory_space<vmem>>, vector<1x512xf32>
    %21 = vector.broadcast %20 : vector<1x512xf32> to vector<8x512xf32>
    %22 = arith.addf %19, %21 : vector<8x512xf32>
    %c0_15 = arith.constant 0 : index
    %c0_16 = arith.constant 0 : index
    %23 = vector.load %arg7[%c0_15, %c0_16] : memref<8x512xf32, #tpu.memory_space<vmem>>, vector<8x512xf32>
    tpu.vector_store %arg7[%c0_15, %c0_16], %22 {strides = array<i32>} : memref<8x512xf32, #tpu.memory_space<vmem>>, vector<8x512xf32>,
    return
  }
  func.func @transform_0(%arg0: i32) -> (i32, i32) {
    %c0_i32 = arith.constant 0 : i32
    %c0_i32_0 = arith.constant 0 : i32
    return %arg0, %c0_i32 : i32, i32
  }
  func.func @transform_1(%arg0: i32) -> (i32, i32) {
    %c0_i32 = arith.constant 0 : i32
    %c0_i32_0 = arith.constant 0 : i32
    %c0_i32_1 = arith.constant 0 : i32
    return %c0_i32, %c0_i32_0 : i32, i32
  }
  func.func @transform_2(%arg0: i32) -> (i32, i32) {
    %c0_i32 = arith.constant 0 : i32
    %c0_i32_0 = arith.constant 0 : i32
    %c0_i32_1 = arith.constant 0 : i32
    return %c0_i32, %c0_i32_0 : i32, i32
  }
  func.func @transform_3(%arg0: i32) -> (i32, i32) {
    %c0_i32 = arith.constant 0 : i32
    %c0_i32_0 = arith.constant 0 : i32
    %c0_i32_1 = arith.constant 0 : i32
    return %c0_i32, %c0_i32_0 : i32, i32
  }
  func.func @transform_4(%arg0: i32) -> (i32, i32) {
    %c0_i32 = arith.constant 0 : i32
    %c0_i32_0 = arith.constant 0 : i32
    %c0_i32_1 = arith.constant 0 : i32
    return %c0_i32, %c0_i32_0 : i32, i32
  }
  func.func @transform_5(%arg0: i32) -> (i32, i32) {
    %c0_i32 = arith.constant 0 : i32
    %c0_i32_0 = arith.constant 0 : i32
    %c0_i32_1 = arith.constant 0 : i32
    return %c0_i32, %c0_i32_0 : i32, i32
  }
  func.func @transform_6(%arg0: i32) -> (i32, i32) {
    %c0_i32 = arith.constant 0 : i32
    %c0_i32_0 = arith.constant 0 : i32
    return %arg0, %c0_i32 : i32, i32
  }
}

</mosaic_0001>

<llo_original>
// kernel: tpu_custom_call.1
$region0: #{tpu_custom_call.1}
  #allocation0 [shape = 'u32[]', space=smem, size = 0x4, offset = 0x4, fixed_abs, tag = 'smem constant byte address 0x4 - core index']
  #allocation1 [shape = 'u32[72,128]{1,0:T(1,128)}', space=vmem, size = 0x9000, scoped, tag = 'internal scratch']
  %s0 = inlined_call_operand.vmem [shape: s32[8,1], index: 0, kind: input, shape index: {}]
  %s1 = inlined_call_operand.hbm [shape: bf16[128,128], index: 1, kind: input, shape index: {}]
  %s2 = inlined_call_operand.hbm [shape: bf16[128,128], index: 2, kind: input, shape index: {}]
  %s3 = inlined_call_operand.vmem [shape: f32[1,128], index: 3, kind: input, shape index: {}]
  %s4 = inlined_call_operand.hbm [shape: bf16[128,512], index: 4, kind: input, shape index: {}]
  %s5 = inlined_call_operand.vmem [shape: f32[1,512], index: 5, kind: input, shape index: {}]
  %s6 = inlined_call_operand.hbm [shape: f32[8,512], index: 6, kind: output, shape index: {}]
  %s7 = sld [smem:[#allocation0]]
  $region46: #{tpu_custom_call.1} parent=0
    _
  %s9 = ssub.s32 1, %s7
  %s10 = scalar_select 0, %s9, %s7
  $region1: #{tpu_custom_call.1} parent=0
    #allocation2 [shape = 'u8[32768]{0}', space=vmem, size = 0x8000, scoped, tag = 'input window, operand 1, single buffered']
    #allocation3 [shape = 's32[1]{0}', space=sflag, size = 0x4, scoped, tag = 'scoped memory for tpu_custom_call.1']
    #allocation4 [shape = 's32[1]{0}', space=sflag, size = 0x4, scoped, tag = 'scoped memory for tpu_custom_call.1']
    #allocation5 [shape = 'u8[32768]{0}', space=vmem, size = 0x8000, scoped, tag = 'input window, operand 2, single buffered']
    #allocation6 [shape = 's32[1]{0}', space=sflag, size = 0x4, scoped, tag = 'scoped memory for tpu_custom_call.1']
    #allocation7 [shape = 'u8[131072]{0}', space=vmem, size = 0x20000, scoped, tag = 'input window, operand 4, single buffered']
    #allocation8 [shape = 'u8[16384]{0}', space=vmem, size = 0x4000, scoped, tag = 'output window, operand 0, single buffered']
    %11 = vsyncpa [#allocation3], 0
    %12 = vsyncpa [#allocation6], 0
    %13 = vsyncpa [#allocation4], 0
    // Predicated region
    $region2: #{tpu_custom_call.1} parent=1 // pred_check
      _
    $region3: #{tpu_custom_call.1} parent=1 // pred_check_branch
      %15 = sbr.rel (0) target = $region5
    $region4: #{tpu_custom_call.1} parent=1 // pred_region
      _
    $region5: #{tpu_custom_call.1} parent=1 // pred_fallthru
      _
    // Predicated region
    $region6: #{tpu_custom_call.1} parent=1 // pred_check
      _
    $region7: #{tpu_custom_call.1} parent=1 // pred_check_branch
      %17 = sbr.rel (0) target = $region9
    $region8: #{tpu_custom_call.1} parent=1 // pred_region
      %19 = vsyncadd [#allocation3], 0
      %s20 = sshll.u32 %s1, 4
      %s21 = int_to_ptr.hbm [resolvable:$true] %s20
      %s22 = sshll.u32 [#allocation2], 4
      %s23 = int_to_ptr.vmem [resolvable:$true] %s22
      %28 = dma.hbm_to_vmem [thread:$0]  %s21, 1024, %s23, [#allocation3], 64, 64, 4
    $region9: #{tpu_custom_call.1} parent=1 // pred_fallthru
      _
    // Predicated region
    $region10: #{tpu_custom_call.1} parent=1 // pred_check
      _
    $region11: #{tpu_custom_call.1} parent=1 // pred_check_branch
      %30 = sbr.rel (0) target = $region13
    $region12: #{tpu_custom_call.1} parent=1 // pred_region
      %32 = vsyncadd [#allocation6], 0
      %s33 = sshll.u32 %s2, 4
      %s34 = int_to_ptr.hbm [resolvable:$true] %s33
      %s35 = sshll.u32 [#allocation5], 4
      %s36 = int_to_ptr.vmem [resolvable:$true] %s35
      %41 = dma.hbm_to_vmem [thread:$0]  %s34, 1024, %s36, [#allocation6], 64, 64, 4
    $region13: #{tpu_custom_call.1} parent=1 // pred_fallthru
      _
    // Predicated region
    $region14: #{tpu_custom_call.1} parent=1 // pred_check
      _
    $region15: #{tpu_custom_call.1} parent=1 // pred_check_branch
      %43 = sbr.rel (0) target = $region17
    $region16: #{tpu_custom_call.1} parent=1 // pred_region
      _
    $region17: #{tpu_custom_call.1} parent=1 // pred_fallthru
      _
    // Predicated region
    $region18: #{tpu_custom_call.1} parent=1 // pred_check
      _
    $region19: #{tpu_custom_call.1} parent=1 // pred_check_branch
      %45 = sbr.rel (0) target = $region21
    $region20: #{tpu_custom_call.1} parent=1 // pred_region
      %47 = vsyncadd [#allocation6], 0
      %s48 = sshll.u32 %s4, 4
      %s49 = int_to_ptr.hbm [resolvable:$true] %s48
      %s50 = sshll.u32 [#allocation7], 4
      %s51 = int_to_ptr.vmem [resolvable:$true] %s50
      %56 = dma.hbm_to_vmem [thread:$0]  %s49, 4096, %s51, [#allocation6], 256, 256, 16
    $region21: #{tpu_custom_call.1} parent=1 // pred_fallthru
      _
    // Predicated region
    $region22: #{tpu_custom_call.1} parent=1 // pred_check
      _
    $region23: #{tpu_custom_call.1} parent=1 // pred_check_branch
      %58 = sbr.rel (0) target = $region25
    $region24: #{tpu_custom_call.1} parent=1 // pred_region
      _
    $region25: #{tpu_custom_call.1} parent=1 // pred_fallthru
      _
    // Predicated region
    $region26: #{tpu_custom_call.1} parent=1 // pred_check
      _
    $region27: #{tpu_custom_call.1} parent=1 // pred_check_branch
      %60 = sbr.rel (0) target = $region29
    $region28: #{tpu_custom_call.1} parent=1 // pred_region
      %62 = dma.done [#allocation3], 1024
    $region29: #{tpu_custom_call.1} parent=1 // pred_fallthru
      _
    // Predicated region
    $region30: #{tpu_custom_call.1} parent=1 // pred_check
      _
    $region31: #{tpu_custom_call.1} parent=1 // pred_check_branch
      %64 = sbr.rel (0) target = $region33
    $region32: #{tpu_custom_call.1} parent=1 // pred_region
      %66 = dma.done [#allocation6], 1024
    $region33: #{tpu_custom_call.1} parent=1 // pred_fallthru
      _
    // Predicated region
    $region34: #{tpu_custom_call.1} parent=1 // pred_check
      _
    $region35: #{tpu_custom_call.1} parent=1 // pred_check_branch
      %68 = sbr.rel (0) target = $region37
    $region36: #{tpu_custom_call.1} parent=1 // pred_region
      %70 = dma.done [#allocation6], 4096
    $region37: #{tpu_custom_call.1} parent=1 // pred_fallthru
      _
    %v71 = vld [vmem:[%s0] sm:$0xff]
    %v72 = vlaneseq
    %v73 = vand.u32 %v72, 127
    %74 = vset.pattern.permute.xlu0 0
    %75 = vperm.xlu0 %74, %v71
    %v76 = vpop.permute.xlu0 %75
    %vm77 = vcmp.eq.s32.totalorder %v76, %v73
    %v78 = vsel %vm77, 1.0, 0.0
    %v79 = vpack.c.bf16 %v78, %v78
    %v80 = vld [vmem:[#allocation2] sm:$0xf]
    %v81 = vld [vmem:[#allocation2 + $0x4] sm:$0xf]
    %v82 = vld [vmem:[#allocation2 + $0x8] sm:$0xf]
    %v83 = vld [vmem:[#allocation2 + $0xc] sm:$0xf]
    %v84 = vld [vmem:[#allocation2 + $0x10] sm:$0xf]
    %v85 = vld [vmem:[#allocation2 + $0x14] sm:$0xf]
    %v86 = vld [vmem:[#allocation2 + $0x18] sm:$0xf]
    %v87 = vld [vmem:[#allocation2 + $0x1c] sm:$0xf]
    %v88 = vld [vmem:[#allocation2 + $0x20] sm:$0xf]
    %v89 = vld [vmem:[#allocation2 + $0x24] sm:$0xf]
    %v90 = vld [vmem:[#allocation2 + $0x28] sm:$0xf]
    %v91 = vld [vmem:[#allocation2 + $0x2c] sm:$0xf]
    %v92 = vld [vmem:[#allocation2 + $0x30] sm:$0xf]
    %v93 = vld [vmem:[#allocation2 + $0x34] sm:$0xf]
    %v94 = vld [vmem:[#allocation2 + $0x38] sm:$0xf]
    %v95 = vld [vmem:[#allocation2 + $0x3c] sm:$0xf]
    %v112 = vunpack.c.l.b16 %v80
    %v113 = vunpack.c.l.b16 %v81
    %v114 = vunpack.c.l.b16 %v82
    %v115 = vunpack.c.l.b16 %v83
    %v116 = vunpack.c.l.b16 %v84
    %v117 = vunpack.c.l.b16 %v85
    %v118 = vunpack.c.l.b16 %v86
    %v119 = vunpack.c.l.b16 %v87
    %v120 = vunpack.c.l.b16 %v88
    %v121 = vunpack.c.l.b16 %v89
    %v122 = vunpack.c.l.b16 %v90
    %v123 = vunpack.c.l.b16 %v91
    %v124 = vunpack.c.l.b16 %v92
    %v125 = vunpack.c.l.b16 %v93
    %v126 = vunpack.c.l.b16 %v94
    %v127 = vunpack.c.l.b16 %v95
    %v128 = vpack.c.b16 %v113, %v112
    %v129 = vpack.c.b16 %v115, %v114
    %v130 = vpack.c.b16 %v117, %v116
    %v131 = vpack.c.b16 %v119, %v118
    %v132 = vpack.c.b16 %v121, %v120
    %v133 = vpack.c.b16 %v123, %v122
    %v134 = vpack.c.b16 %v125, %v124
    %v135 = vpack.c.b16 %v127, %v126
    %144 = vmatpush.bf16.msra.mxu0 %v135
    %145 = vmatpush.bf16.msra.mxu0 %v134
    %146 = vmatpush.bf16.msra.mxu0 %v133
    %147 = vmatpush.bf16.msra.mxu0 %v132
    %148 = vmatpush.bf16.msra.mxu0 %v131
    %149 = vmatpush.bf16.msra.mxu0 %v130
    %150 = vmatpush.bf16.msra.mxu0 %v129
    %151 = vmatpush.bf16.msra.mxu0 %v128
    %152 = vmatmul.bf16.gmra.mxu0 %v79
    %v153 = vpop.f32.mrf.mxu0
    %v154 = vadd.f32 0.0, %v153
    %v155 = vpop.f32.mrf.mxu0
    %156 = vdwg.mxu0
    %v157 = vpack.c.bf16 %v154, %v154
    %v158 = vld [vmem:[#allocation5] sm:$0xf]
    %v159 = vld [vmem:[#allocation5 + $0x4] sm:$0xf]
    %v160 = vld [vmem:[#allocation5 + $0x8] sm:$0xf]
    %v161 = vld [vmem:[#allocation5 + $0xc] sm:$0xf]
    %v162 = vld [vmem:[#allocation5 + $0x10] sm:$0xf]
    %v163 = vld [vmem:[#allocation5 + $0x14] sm:$0xf]
    %v164 = vld [vmem:[#allocation5 + $0x18] sm:$0xf]
    %v165 = vld [vmem:[#allocation5 + $0x1c] sm:$0xf]
    %v166 = vld [vmem:[#allocation5 + $0x20] sm:$0xf]
    %v167 = vld [vmem:[#allocation5 + $0x24] sm:$0xf]
    %v168 = vld [vmem:[#allocation5 + $0x28] sm:$0xf]
    %v169 = vld [vmem:[#allocation5 + $0x2c] sm:$0xf]
    %v170 = vld [vmem:[#allocation5 + $0x30] sm:$0xf]
    %v171 = vld [vmem:[#allocation5 + $0x34] sm:$0xf]
    %v172 = vld [vmem:[#allocation5 + $0x38] sm:$0xf]
    %v173 = vld [vmem:[#allocation5 + $0x3c] sm:$0xf]
    %v174 = vld [vmem:[%s3] sm:$0x1]
    %v176 = vperm.slane %v174, 0
    %v194 = vunpack.c.l.b16 %v158
    %v195 = vunpack.c.l.b16 %v159
    %v196 = vunpack.c.l.b16 %v160
    %v197 = vunpack.c.l.b16 %v161
    %v198 = vunpack.c.l.b16 %v162
    %v199 = vunpack.c.l.b16 %v163
    %v200 = vunpack.c.l.b16 %v164
    %v201 = vunpack.c.l.b16 %v165
    %v202 = vunpack.c.l.b16 %v166
    %v203 = vunpack.c.l.b16 %v167
    %v204 = vunpack.c.l.b16 %v168
    %v205 = vunpack.c.l.b16 %v169
    %v206 = vunpack.c.l.b16 %v170
    %v207 = vunpack.c.l.b16 %v171
    %v208 = vunpack.c.l.b16 %v172
    %v209 = vunpack.c.l.b16 %v173
    %v210 = vpack.c.b16 %v195, %v194
    %v211 = vpack.c.b16 %v197, %v196
    %v212 = vpack.c.b16 %v199, %v198
    %v213 = vpack.c.b16 %v201, %v200
    %v214 = vpack.c.b16 %v203, %v202
    %v215 = vpack.c.b16 %v205, %v204
    %v216 = vpack.c.b16 %v207, %v206
    %v217 = vpack.c.b16 %v209, %v208
    %226 = vmatpush.bf16.msra.mxu0 %v217
    %227 = vmatpush.bf16.msra.mxu0 %v216
    %228 = vmatpush.bf16.msra.mxu0 %v215
    %229 = vmatpush.bf16.msra.mxu0 %v214
    %230 = vmatpush.bf16.msra.mxu0 %v213
    %231 = vmatpush.bf16.msra.mxu0 %v212
    %232 = vmatpush.bf16.msra.mxu0 %v211
    %233 = vmatpush.bf16.msra.mxu0 %v210
    %234 = vmatmul.bf16.gmra.mxu0 %v157
    %v235 = vpop.f32.mrf.mxu0
    %v236 = vadd.f32 %v176, %v235
    %v237 = vpop.f32.mrf.mxu0
    %238 = vdwg.mxu0
    %v239 = vtanh.pop %v236
    %v240 = vpack.c.bf16 %v239, %v239
    %v241 = vld [vmem:[#allocation7] sm:$0xff]
    %v242 = vld [vmem:[#allocation7 + $0x8] sm:$0xff]
    %v243 = vld [vmem:[#allocation7 + $0x10] sm:$0xff]
    %v244 = vld [vmem:[#allocation7 + $0x18] sm:$0xff]
    %v245 = vld [vmem:[#allocation7 + $0x20] sm:$0xff]
    %v246 = vld [vmem:[#allocation7 + $0x28] sm:$0xff]
    %v247 = vld [vmem:[#allocation7 + $0x30] sm:$0xff]
    %v248 = vld [vmem:[#allocation7 + $0x38] sm:$0xff]
    %v249 = vld [vmem:[#allocation7 + $0x40] sm:$0xff]
    %v250 = vld [vmem:[#allocation7 + $0x48] sm:$0xff]
    %v251 = vld [vmem:[#allocation7 + $0x50] sm:$0xff]
    %v252 = vld [vmem:[#allocation7 + $0x58] sm:$0xff]
    %v253 = vld [vmem:[#allocation7 + $0x60] sm:$0xff]
    %v254 = vld [vmem:[#allocation7 + $0x68] sm:$0xff]
    %v255 = vld [vmem:[#allocation7 + $0x70] sm:$0xff]
    %v256 = vld [vmem:[#allocation7 + $0x78] sm:$0xff]
    %v257 = vld [vmem:[#allocation7 + $0x80] sm:$0xff]
    %v258 = vld [vmem:[#allocation7 + $0x88] sm:$0xff]
    %v259 = vld [vmem:[#allocation7 + $0x90] sm:$0xff]
    %v260 = vld [vmem:[#allocation7 + $0x98] sm:$0xff]
    %v261 = vld [vmem:[#allocation7 + $0xa0] sm:$0xff]
    %v262 = vld [vmem:[#allocation7 + $0xa8] sm:$0xff]
    %v263 = vld [vmem:[#allocation7 + $0xb0] sm:$0xff]
    %v264 = vld [vmem:[#allocation7 + $0xb8] sm:$0xff]
    %v265 = vld [vmem:[#allocation7 + $0xc0] sm:$0xff]
    %v266 = vld [vmem:[#allocation7 + $0xc8] sm:$0xff]
    %v267 = vld [vmem:[#allocation7 + $0xd0] sm:$0xff]
    %v268 = vld [vmem:[#allocation7 + $0xd8] sm:$0xff]
    %v269 = vld [vmem:[#allocation7 + $0xe0] sm:$0xff]
    %v270 = vld [vmem:[#allocation7 + $0xe8] sm:$0xff]
    %v271 = vld [vmem:[#allocation7 + $0xf0] sm:$0xff]
    %v272 = vld [vmem:[#allocation7 + $0xf8] sm:$0xff]
    %v273 = vld [vmem:[%s5] sm:$0xf]
    %v275 = vperm.slane %v273, 0
    %v276 = vperm.slane %v273, 1
    %v277 = vperm.slane %v273, 2
    %v278 = vperm.slane %v273, 3
    %v315 = vunpack.c.l.b16 %v241
    %v316 = vunpack.c.h.b16 %v241
    %v317 = vunpack.c.l.b16 %v242
    %v318 = vunpack.c.h.b16 %v242
    %v319 = vunpack.c.l.b16 %v243
    %v320 = vunpack.c.h.b16 %v243
    %v321 = vunpack.c.l.b16 %v244
    %v322 = vunpack.c.h.b16 %v244
    %v323 = vunpack.c.l.b16 %v245
    %v324 = vunpack.c.h.b16 %v245
    %v325 = vunpack.c.l.b16 %v246
    %v326 = vunpack.c.h.b16 %v246
    %v327 = vunpack.c.l.b16 %v247
    %v328 = vunpack.c.h.b16 %v247
    %v329 = vunpack.c.l.b16 %v248
    %v330 = vunpack.c.h.b16 %v248
    %v331 = vunpack.c.l.b16 %v249
    %v332 = vunpack.c.h.b16 %v249
    %v333 = vunpack.c.l.b16 %v250
    %v334 = vunpack.c.h.b16 %v250
    %v335 = vunpack.c.l.b16 %v251
    %v336 = vunpack.c.h.b16 %v251
    %v337 = vunpack.c.l.b16 %v252
    %v338 = vunpack.c.h.b16 %v252
    %v339 = vunpack.c.l.b16 %v253
    %v340 = vunpack.c.h.b16 %v253
    %v341 = vunpack.c.l.b16 %v254
    %v342 = vunpack.c.h.b16 %v254
    %v343 = vunpack.c.l.b16 %v255
    %v344 = vunpack.c.h.b16 %v255
    %v345 = vunpack.c.l.b16 %v256
    %v346 = vunpack.c.h.b16 %v256
    %v347 = vunpack.c.l.b16 %v257
    %v348 = vunpack.c.h.b16 %v257
    %v349 = vunpack.c.l.b16 %v258
    %v350 = vunpack.c.h.b16 %v258
    %v351 = vunpack.c.l.b16 %v259
    %v352 = vunpack.c.h.b16 %v259
    %v353 = vunpack.c.l.b16 %v260
    %v354 = vunpack.c.h.b16 %v260
    %v355 = vunpack.c.l.b16 %v261
    %v356 = vunpack.c.h.b16 %v261
    %v357 = vunpack.c.l.b16 %v262
    %v358 = vunpack.c.h.b16 %v262
    %v359 = vunpack.c.l.b16 %v263
    %v360 = vunpack.c.h.b16 %v263
    %v361 = vunpack.c.l.b16 %v264
    %v362 = vunpack.c.h.b16 %v264
    %v363 = vunpack.c.l.b16 %v265
    %v364 = vunpack.c.h.b16 %v265
    %v365 = vunpack.c.l.b16 %v266
    %v366 = vunpack.c.h.b16 %v266
    %v367 = vunpack.c.l.b16 %v267
    %v368 = vunpack.c.h.b16 %v267
    %v369 = vunpack.c.l.b16 %v268
    %v370 = vunpack.c.h.b16 %v268
    %v371 = vunpack.c.l.b16 %v269
    %v372 = vunpack.c.h.b16 %v269
    %v373 = vunpack.c.l.b16 %v270
    %v374 = vunpack.c.h.b16 %v270
    %v375 = vunpack.c.l.b16 %v271
    %v376 = vunpack.c.h.b16 %v271
    %v377 = vunpack.c.l.b16 %v272
    %v378 = vunpack.c.h.b16 %v272
    %v379 = vpack.c.b16 %v319, %v315
    %v380 = vpack.c.b16 %v320, %v316
    %v381 = vpack.c.b16 %v321, %v317
    %v382 = vpack.c.b16 %v322, %v318
    %v383 = vpack.c.b16 %v327, %v323
    %v384 = vpack.c.b16 %v328, %v324
    %v385 = vpack.c.b16 %v329, %v325
    %v386 = vpack.c.b16 %v330, %v326
    %v387 = vpack.c.b16 %v335, %v331
    %v388 = vpack.c.b16 %v336, %v332
    %v389 = vpack.c.b16 %v337, %v333
    %v390 = vpack.c.b16 %v338, %v334
    %v391 = vpack.c.b16 %v343, %v339
    %v392 = vpack.c.b16 %v344, %v340
    %v393 = vpack.c.b16 %v345, %v341
    %v394 = vpack.c.b16 %v346, %v342
    %v395 = vpack.c.b16 %v351, %v347
    %v396 = vpack.c.b16 %v352, %v348
    %v397 = vpack.c.b16 %v353, %v349
    %v398 = vpack.c.b16 %v354, %v350
    %v399 = vpack.c.b16 %v359, %v355
    %v400 = vpack.c.b16 %v360, %v356
    %v401 = vpack.c.b16 %v361, %v357
    %v402 = vpack.c.b16 %v362, %v358
    %v403 = vpack.c.b16 %v367, %v363
    %v404 = vpack.c.b16 %v368, %v364
    %v405 = vpack.c.b16 %v369, %v365
    %v406 = vpack.c.b16 %v370, %v366
    %v407 = vpack.c.b16 %v375, %v371
    %v408 = vpack.c.b16 %v376, %v372
    %v409 = vpack.c.b16 %v377, %v373
    %v410 = vpack.c.b16 %v378, %v374
    %443 = vmatpush.bf16.msra.mxu0 %v407
    %444 = vmatpush.bf16.msra.mxu0 %v403
    %445 = vmatpush.bf16.msra.mxu0 %v399
    %446 = vmatpush.bf16.msra.mxu0 %v395
    %447 = vmatpush.bf16.msra.mxu0 %v391
    %448 = vmatpush.bf16.msra.mxu0 %v387
    %449 = vmatpush.bf16.msra.mxu0 %v383
    %450 = vmatpush.bf16.msra.mxu0 %v379
    %451 = vmatmul.bf16.gmra.mxu0 %v240
    %v452 = vpop.f32.mrf.mxu0
    %v453 = vadd.f32 %v275, %v452
    %v454 = vpop.f32.mrf.mxu0
    %455 = vdwg.mxu0
    %456 = vmatpush.bf16.msra.mxu0 %v408
    %457 = vmatpush.bf16.msra.mxu0 %v404
    %458 = vmatpush.bf16.msra.mxu0 %v400
    %459 = vmatpush.bf16.msra.mxu0 %v396
    %460 = vmatpush.bf16.msra.mxu0 %v392
    %461 = vmatpush.bf16.msra.mxu0 %v388
    %462 = vmatpush.bf16.msra.mxu0 %v384
    %463 = vmatpush.bf16.msra.mxu0 %v380
    %464 = vmatmul.bf16.gmra.mxu0 %v240
    %v465 = vpop.f32.mrf.mxu0
    %v466 = vadd.f32 %v276, %v465
    %v467 = vpop.f32.mrf.mxu0
    %468 = vdwg.mxu0
    %469 = vmatpush.bf16.msra.mxu0 %v409
    %470 = vmatpush.bf16.msra.mxu0 %v405
    %471 = vmatpush.bf16.msra.mxu0 %v401
    %472 = vmatpush.bf16.msra.mxu0 %v397
    %473 = vmatpush.bf16.msra.mxu0 %v393
    %474 = vmatpush.bf16.msra.mxu0 %v389
    %475 = vmatpush.bf16.msra.mxu0 %v385
    %476 = vmatpush.bf16.msra.mxu0 %v381
    %477 = vmatmul.bf16.gmra.mxu0 %v240
    %v478 = vpop.f32.mrf.mxu0
    %v479 = vadd.f32 %v277, %v478
    %v480 = vpop.f32.mrf.mxu0
    %481 = vdwg.mxu0
    %482 = vmatpush.bf16.msra.mxu0 %v410
    %483 = vmatpush.bf16.msra.mxu0 %v406
    %484 = vmatpush.bf16.msra.mxu0 %v402
    %485 = vmatpush.bf16.msra.mxu0 %v398
    %486 = vmatpush.bf16.msra.mxu0 %v394
    %487 = vmatpush.bf16.msra.mxu0 %v390
    %488 = vmatpush.bf16.msra.mxu0 %v386
    %489 = vmatpush.bf16.msra.mxu0 %v382
    %490 = vmatmul.bf16.gmra.mxu0 %v240
    %v491 = vpop.f32.mrf.mxu0
    %v492 = vadd.f32 %v278, %v491
    %v493 = vpop.f32.mrf.mxu0
    %494 = vdwg.mxu0
    %495 = vst [vmem:[#allocation8] sm:$0xff] %v453
    %496 = vst [vmem:[#allocation8 + $0x8] sm:$0xff] %v466
    %497 = vst [vmem:[#allocation8 + $0x10] sm:$0xff] %v479
    %498 = vst [vmem:[#allocation8 + $0x18] sm:$0xff] %v492
    // Predicated region
    $region38: #{tpu_custom_call.1} parent=1 // pred_check
      _
    $region39: #{tpu_custom_call.1} parent=1 // pred_check_branch
      %500 = sbr.rel (0) target = $region41
    $region40: #{tpu_custom_call.1} parent=1 // pred_region
      %502 = vsyncadd [#allocation4], 0
      %s504 = sshll.u32 [#allocation8], 4
      %s505 = int_to_ptr.vmem [resolvable:$true] %s504
      %s506 = sshll.u32 %s6, 4
      %s507 = int_to_ptr.hbm [resolvable:$true] %s506
      %509 = dma.vmem_to_hbm [thread:$0]  %s505, 512, %s507, [#allocation4]
    $region41: #{tpu_custom_call.1} parent=1 // pred_fallthru
      _
    // Predicated region
    $region42: #{tpu_custom_call.1} parent=1 // pred_check
      _
    $region43: #{tpu_custom_call.1} parent=1 // pred_check_branch
      %511 = sbr.rel (0) target = $region45
    $region44: #{tpu_custom_call.1} parent=1 // pred_region
      %513 = dma.done [#allocation4], 512
    $region45: #{tpu_custom_call.1} parent=1 // pred_fallthru
      _
    %514 = vsyncpa [#allocation3], 1
    %515 = vsyncpa [#allocation6], 1
    %516 = vsyncpa [#allocation4], 1

</llo_original>
